<compile_context>
chip_gen: v6e
topology: v6e:2x2x1
jax: 0.10.0
libtpu: 0.0.40
codegen_flags: <defaults>
</compile_context>

<pallas_src>
import jax
import jax.numpy as jnp
from jax.experimental import pallas as pl
from jax.experimental.pallas import tpu as pltpu


def _pack_biases(biases):
    """Concatenate bias column-vectors into one (rows, 1) f32 operand.

    Each segment is padded to a multiple of 8 rows so every in-kernel static
    slice starts on a sublane boundary.  Returns (packed, offsets).
    """
    segs, offs, off = [], [], 0
    for b in biases:
        b = jnp.asarray(b, jnp.float32).reshape(-1, 1)
        n = b.shape[0]
        pad = (-n) % 8
        segs.append(jnp.pad(b, ((0, pad), (0, 0))) if pad else b)
        offs.append(off)
        off += n + pad
    return jnp.concatenate(segs, axis=0), tuple(offs)


def _make_kernel(h1, h2, h3, offs):
    o1, o2, o3, o4 = offs

    def kernel(x_ref, w1_ref, w2_ref, w3_ref, w4_ref, b_ref, o_ref):
        # x_ref: (input_dim, TB) bf16   w_i: (out, in) bf16   b_ref: (rows, 1) f32
        # Layer 1 + ReLU (dropout = identity in eval mode); bf16 in, f32 acc.
        h = jnp.dot(w1_ref[...], x_ref[...],
                    preferred_element_type=jnp.float32)          # (h1, TB)
        h = jnp.maximum(h + b_ref[o1:o1 + h1, :], 0.0)
        # Layer 2 + ReLU
        h = jnp.dot(w2_ref[...], h.astype(jnp.bfloat16),
                    preferred_element_type=jnp.float32)          # (h2, TB)
        h = jnp.maximum(h + b_ref[o2:o2 + h2, :], 0.0)
        # Layer 3 + ReLU
        h = jnp.dot(w3_ref[...], h.astype(jnp.bfloat16),
                    preferred_element_type=jnp.float32)          # (h3, TB)
        h = jnp.maximum(h + b_ref[o3:o3 + h3, :], 0.0)
        # Output layer + sigmoid — already lane-dense: (1, h3).(h3, TB) -> (1, TB)
        logits = jnp.dot(w4_ref[...], h.astype(jnp.bfloat16),
                         preferred_element_type=jnp.float32)
        o_ref[...] = jax.nn.sigmoid(logits + b_ref[o4:o4 + 1, :])

    return kernel


def binary_classification_nn_forward(x, params, *, tb=None):
    """x: (batch, input_dim) f32.  params: torch-layout w_i (out,in), b_i (out,).

    Returns (batch, 1) f32 == sigmoid(L4(relu(L3(relu(L2(relu(L1(x))))))))."""
    batch, input_dim = x.shape
    h1 = params["w1"].shape[0]
    h2 = params["w2"].shape[0]
    h3 = params["w3"].shape[0]
    hsum = h1 + h2 + h3

    # ---- batch-tile selection (batch rides the lane axis) -------------------
    bp = pl.cdiv(batch, 128) * 128                     # lane-aligned batch
    if tb is None:
        # Conservative per-column VMEM budget: double-buffered x tile (bf16)
        # + f32/bf16 activation temps + double-buffered f32 output.
        bytes_per_col = 4 * input_dim + 6 * hsum + 8
        tb = ((8 * 1024 * 1024) // bytes_per_col) // 128 * 128
        tb = max(128, min(tb, 4096, bp))
        if tb >= bp and bp >= 256:
            # Keep >= 2 grid steps so the "parallel" axis can use both v7x cores.
            tb = pl.cdiv(bp // 2, 128) * 128
    else:
        tb = max(128, min((tb // 128) * 128, bp))
    num_tiles = pl.cdiv(batch, tb)

    # ---- feature-major operands ---------------------------------------------
    # Single fused transpose+cast of x; weights already (out, in); no padding —
    # the last grid block overhangs and its OOB output lanes are clipped.
    xt = x.T.astype(jnp.bfloat16)                      # (input_dim, batch)
    w1 = params["w1"].astype(jnp.bfloat16)
    w2 = params["w2"].astype(jnp.bfloat16)
    w3 = params["w3"].astype(jnp.bfloat16)
    w4 = params["w4"].reshape(1, h3).astype(jnp.bfloat16)
    b_all, offs = _pack_biases(
        [params["b1"], params["b2"], params["b3"], params["b4"]])
    b_rows = b_all.shape[0]

    kernel = _make_kernel(h1, h2, h3, offs)
    const = lambda i: (0, 0)                           # resident weights/biases

    flops = 2 * batch * (input_dim * h1 + h1 * h2 + h2 * h3 + h3)
    bytes_accessed = (xt.size * 2
                      + (w1.size + w2.size + w3.size + w4.size) * 2
                      + b_all.size * 4 + batch * 4)

    out = pl.pallas_call(
        kernel,
        out_shape=jax.ShapeDtypeStruct((1, batch), jnp.float32),
        grid=(num_tiles,),
        in_specs=[
            pl.BlockSpec((input_dim, tb), lambda i: (0, i)),   # x^T tile
            pl.BlockSpec((h1, input_dim), const),              # w1
            pl.BlockSpec((h2, h1), const),                     # w2
            pl.BlockSpec((h3, h2), const),                     # w3
            pl.BlockSpec((1, h3), const),                      # w4
            pl.BlockSpec((b_rows, 1), const),                  # packed biases
        ],
        out_specs=pl.BlockSpec((1, tb), lambda i: (0, i)),     # lane-dense out
        compiler_params=pltpu.CompilerParams(
            dimension_semantics=("parallel",)),
        cost_estimate=pl.CostEstimate(
            flops=flops, transcendentals=batch, bytes_accessed=bytes_accessed),
    )(xt, w1, w2, w3, w4, b_all)

    return out.reshape(batch, 1)                       # (1, batch) -> (batch, 1)


def init_params(key, input_dim, num_hidden_units):
    """Deterministic init mimicking torch.nn.Linear (uniform +-1/sqrt(fan_in)),
    in torch layout: w (out, in), b (out,)."""
    dims = [
        (input_dim, num_hidden_units),
        (num_hidden_units, num_hidden_units // 2),
        (num_hidden_units // 2, num_hidden_units // 4),
        (num_hidden_units // 4, 1),
    ]
    params = {}
    for i, (fan_in, fan_out) in enumerate(dims, start=1):
        key, kw, kb = jax.random.split(key, 3)
        bound = 1.0 / float(fan_in) ** 0.5
        params[f"w{i}"] = jax.random.uniform(
            kw, (fan_out, fan_in), jnp.float32, minval=-bound, maxval=bound)
        params[f"b{i}"] = jax.random.uniform(
            kb, (fan_out,), jnp.float32, minval=-bound, maxval=bound)
    return params


def _reference_forward(x, params):
    """Pure-JAX reference with identical bf16-operand / f32-accumulate math."""
    h = x.astype(jnp.bfloat16)
    for i in (1, 2, 3):
        h = jnp.dot(h, params[f"w{i}"].astype(jnp.bfloat16).T,
                    preferred_element_type=jnp.float32) + params[f"b{i}"]
        h = jnp.maximum(h, 0.0).astype(jnp.bfloat16)
    logits = jnp.dot(h, params["w4"].astype(jnp.bfloat16).T,
                     preferred_element_type=jnp.float32) + params["b4"]
    return jax.nn.sigmoid(logits)


if __name__ == "__main__":
    key = jax.random.PRNGKey(0)
    batch, input_dim, num_hidden_units = 1000, 32, 64   # ragged batch: exercises
    kx, kp = jax.random.split(key)                       # the overhanging last block

    x = jax.random.normal(kx, (batch, input_dim), jnp.float32)
    params = init_params(kp, input_dim, num_hidden_units)

    # auto tile -> tb=512, 2 grid steps: exercises double-buffered x, resident
    # weights, the parallel grid axis, and the clipped (masked) final block.
    out = binary_classification_nn_forward(x, params)
    out = jax.block_until_ready(out)

    ref = _reference_forward(x, params)
    assert out.shape == (batch, 1)
    max_err = float(jnp.max(jnp.abs(out - ref)))
    assert jnp.allclose(out, ref, atol=2e-4), max_err
    print("KERNEL_OK")
</pallas_src>

<mosaic_0001>
module attributes {stable_mosaic.version = 11 : i64} {
  func.func @kernel(%arg0: i32, %arg1: memref<32x512xbf16, #tpu.memory_space<vmem>>, %arg2: memref<64x32xbf16, #tpu.memory_space<vmem>>, %arg3: memref<32x64xbf16, #tpu.memory_space<vmem>>, %arg4: memref<16x32xbf16, #tpu.memory_space<vmem>>, %arg5: memref<1x16xbf16, #tpu.memory_space<vmem>>, %arg6: memref<120x1xf32, #tpu.memory_space<vmem>>, %arg7: memref<1x512xf32, #tpu.memory_space<vmem>>) attributes {dimension_semantics = [#tpu.dimension_semantics<parallel>], iteration_bounds = array<i64: 2>, scalar_prefetch = 0 : i64, scratch_operands = 0 : i64, tpu.core_type = #tpu.core_type<tc>, window_params = [{transform_indices = @transform_0, window_bounds = array<i64: 32, 512>}, {pipeline_mode = #tpu.pipeline_mode<synchronous>, transform_indices = @transform_1, window_bounds = array<i64: 64, 32>}, {pipeline_mode = #tpu.pipeline_mode<synchronous>, transform_indices = @transform_2, window_bounds = array<i64: 32, 64>}, {pipeline_mode = #tpu.pipeline_mode<synchronous>, transform_indices = @transform_3, window_bounds = array<i64: 16, 32>}, {pipeline_mode = #tpu.pipeline_mode<synchronous>, transform_indices = @transform_4, window_bounds = array<i64: 1, 16>}, {pipeline_mode = #tpu.pipeline_mode<synchronous>, transform_indices = @transform_5, window_bounds = array<i64: 120, 1>}, {transform_indices = @transform_6, window_bounds = array<i64: 1, 512>}]} {
    %c0 = arith.constant 0 : index
    %c0_0 = arith.constant 0 : index
    %0 = vector.load %arg2[%c0, %c0_0] : memref<64x32xbf16, #tpu.memory_space<vmem>>, vector<64x32xbf16>
    %c0_1 = arith.constant 0 : index
    %c0_2 = arith.constant 0 : index
    %1 = vector.load %arg1[%c0_1, %c0_2] : memref<32x512xbf16, #tpu.memory_space<vmem>>, vector<32x512xbf16>
    %cst = arith.constant dense<0.000000e+00> : vector<64x512xf32>
    %2 = tpu.matmul %0, %1, %cst {dimension_numbers = #tpu.dot_dimension_numbers<[1], [0], [0], [1], [0, 0, 1, 1], [], []>} : vector<64x32xbf16>, vector<32x512xbf16>, vector<64x512xf32> -> vector<64x512xf32>
    %c0_3 = arith.constant 0 : index
    %c0_4 = arith.constant 0 : index
    %3 = vector.load %arg6[%c0_3, %c0_4] : memref<120x1xf32, #tpu.memory_space<vmem>>, vector<64x1xf32>
    %4 = vector.broadcast %3 : vector<64x1xf32> to vector<64x512xf32>
    %5 = arith.addf %2, %4 : vector<64x512xf32>
    %cst_5 = arith.constant 0.000000e+00 : f32
    %6 = vector.broadcast %cst_5 : f32 to vector<64x512xf32>
    %7 = arith.maximumf %5, %6 : vector<64x512xf32>
    %c0_6 = arith.constant 0 : index
    %c0_7 = arith.constant 0 : index
    %8 = vector.load %arg3[%c0_6, %c0_7] : memref<32x64xbf16, #tpu.memory_space<vmem>>, vector<32x64xbf16>
    %9 = arith.truncf %7 : vector<64x512xf32> to vector<64x512xbf16>
    %cst_8 = arith.constant dense<0.000000e+00> : vector<32x512xf32>
    %10 = tpu.matmul %8, %9, %cst_8 {dimension_numbers = #tpu.dot_dimension_numbers<[1], [0], [0], [1], [0, 0, 1, 1], [], []>} : vector<32x64xbf16>, vector<64x512xbf16>, vector<32x512xf32> -> vector<32x512xf32>
    %c64 = arith.constant 64 : index
    %c0_9 = arith.constant 0 : index
    %11 = vector.load %arg6[%c64, %c0_9] : memref<120x1xf32, #tpu.memory_space<vmem>>, vector<32x1xf32>
    %12 = vector.broadcast %11 : vector<32x1xf32> to vector<32x512xf32>
    %13 = arith.addf %10, %12 : vector<32x512xf32>
    %cst_10 = arith.constant 0.000000e+00 : f32
    %14 = vector.broadcast %cst_10 : f32 to vector<32x512xf32>
    %15 = arith.maximumf %13, %14 : vector<32x512xf32>
    %c0_11 = arith.constant 0 : index
    %c0_12 = arith.constant 0 : index
    %16 = vector.load %arg4[%c0_11, %c0_12] : memref<16x32xbf16, #tpu.memory_space<vmem>>, vector<16x32xbf16>
    %17 = arith.truncf %15 : vector<32x512xf32> to vector<32x512xbf16>
    %cst_13 = arith.constant dense<0.000000e+00> : vector<16x512xf32>
    %18 = tpu.matmul %16, %17, %cst_13 {dimension_numbers = #tpu.dot_dimension_numbers<[1], [0], [0], [1], [0, 0, 1, 1], [], []>} : vector<16x32xbf16>, vector<32x512xbf16>, vector<16x512xf32> -> vector<16x512xf32>
    %c96 = arith.constant 96 : index
    %c0_14 = arith.constant 0 : index
    %19 = vector.load %arg6[%c96, %c0_14] : memref<120x1xf32, #tpu.memory_space<vmem>>, vector<16x1xf32>
    %20 = vector.broadcast %19 : vector<16x1xf32> to vector<16x512xf32>
    %21 = arith.addf %18, %20 : vector<16x512xf32>
    %cst_15 = arith.constant 0.000000e+00 : f32
    %22 = vector.broadcast %cst_15 : f32 to vector<16x512xf32>
    %23 = arith.maximumf %21, %22 : vector<16x512xf32>
    %c0_16 = arith.constant 0 : index
    %c0_17 = arith.constant 0 : index
    %24 = vector.load %arg5[%c0_16, %c0_17] : memref<1x16xbf16, #tpu.memory_space<vmem>>, vector<1x16xbf16>
    %25 = arith.truncf %23 : vector<16x512xf32> to vector<16x512xbf16>
    %cst_18 = arith.constant dense<0.000000e+00> : vector<1x512xf32>
    %26 = tpu.matmul %24, %25, %cst_18 {dimension_numbers = #tpu.dot_dimension_numbers<[1], [0], [0], [1], [0, 0, 1, 1], [], []>} : vector<1x16xbf16>, vector<16x512xbf16>, vector<1x512xf32> -> vector<1x512xf32>
    %c112 = arith.constant 112 : index
    %c0_19 = arith.constant 0 : index
    %27 = vector.load %arg6[%c112, %c0_19] : memref<120x1xf32, #tpu.memory_space<vmem>>, vector<1x1xf32>
    %28 = vector.broadcast %27 : vector<1x1xf32> to vector<1x512xf32>
    %29 = arith.addf %26, %28 : vector<1x512xf32>
    %30 = arith.negf %29 : vector<1x512xf32>
    %31 = math.exp %30 : vector<1x512xf32>
    %cst_20 = arith.constant 1.000000e+00 : f32
    %32 = vector.broadcast %cst_20 : f32 to vector<1x512xf32>
    %33 = arith.addf %32, %31 : vector<1x512xf32>
    %34 = arith.divf %32, %33 : vector<1x512xf32>
    %c0_21 = arith.constant 0 : index
    %c0_22 = arith.constant 0 : index
    %35 = vector.load %arg7[%c0_21, %c0_22] : memref<1x512xf32, #tpu.memory_space<vmem>>, vector<1x512xf32>
    tpu.vector_store %arg7[%c0_21, %c0_22], %34 {strides = array<i32>} : memref<1x512xf32, #tpu.memory_space<vmem>>, vector<1x512xf32>,
    return
  }
  func.func @transform_0(%arg0: i32) -> (i32, i32) {
    %c0_i32 = arith.constant 0 : i32
    %c0_i32_0 = arith.constant 0 : i32
    return %c0_i32, %arg0 : i32, i32
  }
  func.func @transform_1(%arg0: i32) -> (i32, i32) {
    %c0_i32 = arith.constant 0 : i32
    %c0_i32_0 = arith.constant 0 : i32
    %c0_i32_1 = arith.constant 0 : i32
    return %c0_i32, %c0_i32_0 : i32, i32
  }
  func.func @transform_2(%arg0: i32) -> (i32, i32) {
    %c0_i32 = arith.constant 0 : i32
    %c0_i32_0 = arith.constant 0 : i32
    %c0_i32_1 = arith.constant 0 : i32
    return %c0_i32, %c0_i32_0 : i32, i32
  }
  func.func @transform_3(%arg0: i32) -> (i32, i32) {
    %c0_i32 = arith.constant 0 : i32
    %c0_i32_0 = arith.constant 0 : i32
    %c0_i32_1 = arith.constant 0 : i32
    return %c0_i32, %c0_i32_0 : i32, i32
  }
  func.func @transform_4(%arg0: i32) -> (i32, i32) {
    %c0_i32 = arith.constant 0 : i32
    %c0_i32_0 = arith.constant 0 : i32
    %c0_i32_1 = arith.constant 0 : i32
    return %c0_i32, %c0_i32_0 : i32, i32
  }
  func.func @transform_5(%arg0: i32) -> (i32, i32) {
    %c0_i32 = arith.constant 0 : i32
    %c0_i32_0 = arith.constant 0 : i32
    %c0_i32_1 = arith.constant 0 : i32
    return %c0_i32, %c0_i32_0 : i32, i32
  }
  func.func @transform_6(%arg0: i32) -> (i32, i32) {
    %c0_i32 = arith.constant 0 : i32
    %c0_i32_0 = arith.constant 0 : i32
    return %c0_i32, %arg0 : i32, i32
  }
}

</mosaic_0001>

<llo_original>
// kernel: tpu_custom_call.1
$region0: #{tpu_custom_call.1}
  #allocation0 [shape = 'u32[]', space=smem, size = 0x4, offset = 0x4, fixed_abs, tag = 'smem constant byte address 0x4 - core index']
  #allocation1 [shape = 'u32[144,128]{1,0:T(1,128)}', space=vmem, size = 0x12000, scoped, tag = 'internal scratch']
  %s0 = inlined_call_operand.vmem [shape: bf16[32,1000], index: 0, kind: input, shape index: {}]
  %s1 = inlined_call_operand.vmem [shape: bf16[64,32], index: 1, kind: input, shape index: {}]
  %s2 = inlined_call_operand.vmem [shape: bf16[32,64], index: 2, kind: input, shape index: {}]
  %s3 = inlined_call_operand.vmem [shape: bf16[16,32], index: 3, kind: input, shape index: {}]
  %s4 = inlined_call_operand.vmem [shape: bf16[1,16], index: 4, kind: input, shape index: {}]
  %s5 = inlined_call_operand.vmem [shape: f32[120,1], index: 5, kind: input, shape index: {}]
  %s6 = inlined_call_operand.hbm [shape: f32[1,1000], index: 6, kind: output, shape index: {}]
  %s7 = sld [smem:[#allocation0]]
  $region80: #{tpu_custom_call.1} parent=0
    _
  %s9 = ssub.s32 1, %s7
  %s10 = scalar_select 0, %s9, %s7
  $region1: #{tpu_custom_call.1} parent=0
    #allocation2 [shape = 'u8[65536]{0}', space=vmem, size = 0x10000, scoped, tag = 'input window, operand 0']
    #allocation3 [shape = 'u8[4096]{0}', space=vmem, size = 0x1000, scoped, tag = 'output window, operand 0']
    #allocation4 [shape = 's32[2]{0}', space=sflag, size = 0x8, scoped, tag = 'scoped memory for tpu_custom_call.1']
    %11 = vsyncpa [#allocation4], 0
    %s12 = scalar_lea.sflag [#allocation4], 1
    %13 = vsyncpa %s12, 0
    loop: start=0, step=1, limit=4
    $region2: #{tpu_custom_call.1} parent=1 // loop_pre_header
      _
    $region3: #{tpu_custom_call.1} parent=1 // loop_header
      %s15 = sphi 0, %s19
      %p16 = scmp.ge.s32.totalorder %s15, 4
      %s25 = sphi 0, %s27
      %s28 = sphi 0, %s25
      %s29 = sphi 0, %s28
      %s45 = sphi 0, %s29
      %s49 = sphi 0, %s49
      %s51 = sphi 0, %s49
      %s52 = sphi 0, %s51
      %s66 = sphi 0, %s52
      %s70 = sphi 0, %s70
      %s72 = sphi 0, %s70
      %s73 = sphi 0, %s72
      %s87 = sphi 0, %s73
      %s91 = sphi 0, %s91
      %s93 = sphi 0, %s91
      %s94 = sphi 0, %s93
      %s108 = sphi 0, %s94
      %s112 = sphi 0, %s112
      %s114 = sphi 0, %s112
      %s115 = sphi 0, %s114
      %s129 = sphi 0, %s115
      %s133 = sphi 0, %s133
      %s135 = sphi 0, %s133
      %s136 = sphi 0, %s135
      %s150 = sphi 0, %s136
      %s156 = sphi 0, %s158
      %s159 = sphi 0, %s156
      %s160 = sphi 0, %s159
      %s176 = sphi 0, %s160
    $region4: #{tpu_custom_call.1} parent=1 // loop_header_branch
      %18 = sbr.rel (%p16) target = $region8
    $region5: #{tpu_custom_call.1} parent=1 // loop_body
      %s20 = ssub.s32 %s15, 1
      %s21 = ssub.s32 %s15, 2
      %s22 = sadd.s32 %s15, 1
      %s23 = ssub.s32 %s15, %s22
      %p24 = scmp.eq.s32.totalorder %s23, 0
      %s26 = sadd.s32 %s25, 1
      %s27 = scalar_select %p24, %s25, %s26
      %p30 = pneg %p24
      %p31 = scmp.eq.s32.totalorder %s15, 1
      %p32 = por %p30, %p31
      %p33 = scmp.ne.s32.totalorder %s25, %s28
      %p34 = scmp.eq.s32.totalorder %s15, 0
      %p35 = por %p33, %p34
      %p36 = scmp.ne.s32.totalorder %s25, %s28
      %p37 = scmp.eq.s32.totalorder %s20, 1
      %p38 = por %p36, %p37
      %p39 = scmp.ne.s32.totalorder %s28, %s29
      %p40 = scmp.eq.s32.totalorder %s20, 0
      %p41 = por %p39, %p40
      %p42 = scmp.ne.s32.totalorder %s28, %s29
      %p43 = scmp.eq.s32.totalorder %s21, 1
      %p44 = por %p42, %p43
      %p46 = scmp.ne.s32.totalorder %s29, %s45
      %p47 = scmp.eq.s32.totalorder %s21, 0
      %p48 = por %p46, %p47
      %s50 = sadd.s32 %s49, 1
      %p53 = scmp.eq.s32.totalorder %s15, 1
      %p54 = scmp.ne.s32.totalorder %s49, %s51
      %p55 = scmp.eq.s32.totalorder %s15, 0
      %p56 = por %p54, %p55
      %p57 = scmp.ne.s32.totalorder %s49, %s51
      %p58 = scmp.eq.s32.totalorder %s20, 1
      %p59 = por %p57, %p58
      %p60 = scmp.ne.s32.totalorder %s51, %s52
      %p61 = scmp.eq.s32.totalorder %s20, 0
      %p62 = por %p60, %p61
      %p63 = scmp.ne.s32.totalorder %s51, %s52
      %p64 = scmp.eq.s32.totalorder %s21, 1
      %p65 = por %p63, %p64
      %p67 = scmp.ne.s32.totalorder %s52, %s66
      %p68 = scmp.eq.s32.totalorder %s21, 0
      %p69 = por %p67, %p68
      %s71 = sadd.s32 %s70, 1
      %p74 = scmp.eq.s32.totalorder %s15, 1
      %p75 = scmp.ne.s32.totalorder %s70, %s72
      %p76 = scmp.eq.s32.totalorder %s15, 0
      %p77 = por %p75, %p76
      %p78 = scmp.ne.s32.totalorder %s70, %s72
      %p79 = scmp.eq.s32.totalorder %s20, 1
      %p80 = por %p78, %p79
      %p81 = scmp.ne.s32.totalorder %s72, %s73
      %p82 = scmp.eq.s32.totalorder %s20, 0
      %p83 = por %p81, %p82
      %p84 = scmp.ne.s32.totalorder %s72, %s73
      %p85 = scmp.eq.s32.totalorder %s21, 1
      %p86 = por %p84, %p85
      %p88 = scmp.ne.s32.totalorder %s73, %s87
      %p89 = scmp.eq.s32.totalorder %s21, 0
      %p90 = por %p88, %p89
      %s92 = sadd.s32 %s91, 1
      %p95 = scmp.eq.s32.totalorder %s15, 1
      %p96 = scmp.ne.s32.totalorder %s91, %s93
      %p97 = scmp.eq.s32.totalorder %s15, 0
      %p98 = por %p96, %p97
      %p99 = scmp.ne.s32.totalorder %s91, %s93
      %p100 = scmp.eq.s32.totalorder %s20, 1
      %p101 = por %p99, %p100
      %p102 = scmp.ne.s32.totalorder %s93, %s94
      %p103 = scmp.eq.s32.totalorder %s20, 0
      %p104 = por %p102, %p103
      %p105 = scmp.ne.s32.totalorder %s93, %s94
      %p106 = scmp.eq.s32.totalorder %s21, 1
      %p107 = por %p105, %p106
      %p109 = scmp.ne.s32.totalorder %s94, %s108
      %p110 = scmp.eq.s32.totalorder %s21, 0
      %p111 = por %p109, %p110
      %s113 = sadd.s32 %s112, 1
      %p116 = scmp.eq.s32.totalorder %s15, 1
      %p117 = scmp.ne.s32.totalorder %s112, %s114
      %p118 = scmp.eq.s32.totalorder %s15, 0
      %p119 = por %p117, %p118
      %p120 = scmp.ne.s32.totalorder %s112, %s114
      %p121 = scmp.eq.s32.totalorder %s20, 1
      %p122 = por %p120, %p121
      %p123 = scmp.ne.s32.totalorder %s114, %s115
      %p124 = scmp.eq.s32.totalorder %s20, 0
      %p125 = por %p123, %p124
      %p126 = scmp.ne.s32.totalorder %s114, %s115
      %p127 = scmp.eq.s32.totalorder %s21, 1
      %p128 = por %p126, %p127
      %p130 = scmp.ne.s32.totalorder %s115, %s129
      %p131 = scmp.eq.s32.totalorder %s21, 0
      %p132 = por %p130, %p131
      %s134 = sadd.s32 %s133, 1
      %p137 = scmp.eq.s32.totalorder %s15, 1
      %p138 = scmp.ne.s32.totalorder %s133, %s135
      %p139 = scmp.eq.s32.totalorder %s15, 0
      %p140 = por %p138, %p139
      %p141 = scmp.ne.s32.totalorder %s133, %s135
      %p142 = scmp.eq.s32.totalorder %s20, 1
      %p143 = por %p141, %p142
      %p144 = scmp.ne.s32.totalorder %s135, %s136
      %p145 = scmp.eq.s32.totalorder %s20, 0
      %p146 = por %p144, %p145
      %p147 = scmp.ne.s32.totalorder %s135, %s136
      %p148 = scmp.eq.s32.totalorder %s21, 1
      %p149 = por %p147, %p148
      %p151 = scmp.ne.s32.totalorder %s136, %s150
      %p152 = scmp.eq.s32.totalorder %s21, 0
      %p153 = por %p151, %p152
      %s154 = ssub.s32 %s15, %s22
      %p155 = scmp.eq.s32.totalorder %s154, 0
      %s157 = sadd.s32 %s156, 1
      %s158 = scalar_select %p155, %s156, %s157
      %p161 = pneg %p155
      %p162 = scmp.eq.s32.totalorder %s15, 1
      %p163 = por %p161, %p162
      %p164 = scmp.ne.s32.totalorder %s156, %s159
      %p165 = scmp.eq.s32.totalorder %s15, 0
      %p166 = por %p164, %p165
      %p167 = scmp.ne.s32.totalorder %s156, %s159
      %p168 = scmp.eq.s32.totalorder %s20, 1
      %p169 = por %p167, %p168
      %p170 = scmp.ne.s32.totalorder %s159, %s160
      %p171 = scmp.eq.s32.totalorder %s20, 0
      %p172 = por %p170, %p171
      %p173 = scmp.ne.s32.totalorder %s159, %s160
      %p174 = scmp.eq.s32.totalorder %s21, 1
      %p175 = por %p173, %p174
      %p177 = scmp.ne.s32.totalorder %s160, %s176
      %p178 = scmp.eq.s32.totalorder %s21, 0
      %p179 = por %p177, %p178
      %p180 = scmp.le.s32.totalorder 1, %s15
      %p181 = scmp.lt.s32.totalorder %s15, 3
      %p182 = pnand %p180, %p181
      %p183 = pneg %p182
      // Predicated region
      $region9: #{tpu_custom_call.1} parent=5 // pred_check
        _
      $region10: #{tpu_custom_call.1} parent=5 // pred_check_branch
        %185 = sbr.rel (%p182) target = $region12
      $region11: #{tpu_custom_call.1} parent=5 // pred_region
        %s186 = ssub.s32 %s15, 1
        // Predicated region
        $region13: #{tpu_custom_call.1} parent=11 // pred_check
          %p187 = pneg %p62
        $region14: #{tpu_custom_call.1} parent=11 // pred_check_branch
          %189 = sbr.rel (%p187) target = $region16
        $region15: #{tpu_custom_call.1} parent=11 // pred_region
          _
        $region16: #{tpu_custom_call.1} parent=11 // pred_fallthru
          _
        // Predicated region
        $region17: #{tpu_custom_call.1} parent=11 // pred_check
          %p190 = pneg %p83
        $region18: #{tpu_custom_call.1} parent=11 // pred_check_branch
          %192 = sbr.rel (%p190) target = $region20
        $region19: #{tpu_custom_call.1} parent=11 // pred_region
          _
        $region20: #{tpu_custom_call.1} parent=11 // pred_fallthru
          _
        // Predicated region
        $region21: #{tpu_custom_call.1} parent=11 // pred_check
          %p193 = pneg %p104
        $region22: #{tpu_custom_call.1} parent=11 // pred_check_branch
          %195 = sbr.rel (%p193) target = $region24
        $region23: #{tpu_custom_call.1} parent=11 // pred_region
          _
        $region24: #{tpu_custom_call.1} parent=11 // pred_fallthru
          _
        // Predicated region
        $region25: #{tpu_custom_call.1} parent=11 // pred_check
          %p196 = pneg %p125
        $region26: #{tpu_custom_call.1} parent=11 // pred_check_branch
          %198 = sbr.rel (%p196) target = $region28
        $region27: #{tpu_custom_call.1} parent=11 // pred_region
          _
        $region28: #{tpu_custom_call.1} parent=11 // pred_fallthru
          _
        // Predicated region
        $region29: #{tpu_custom_call.1} parent=11 // pred_check
          %p199 = pneg %p146
        $region30: #{tpu_custom_call.1} parent=11 // pred_check_branch
          %201 = sbr.rel (%p199) target = $region32
        $region31: #{tpu_custom_call.1} parent=11 // pred_region
          _
        $region32: #{tpu_custom_call.1} parent=11 // pred_fallthru
          _
      $region12: #{tpu_custom_call.1} parent=5 // pred_fallthru
        _
      %p202 = scmp.lt.s32.totalorder %s15, 2
      // Predicated region
      $region33: #{tpu_custom_call.1} parent=5 // pred_check
        %p203 = pneg %p202
      $region34: #{tpu_custom_call.1} parent=5 // pred_check_branch
        %205 = sbr.rel (%p203) target = $region36
      $region35: #{tpu_custom_call.1} parent=5 // pred_region
        // Predicated region
        $region37: #{tpu_custom_call.1} parent=35 // pred_check
          %p206 = pneg %p35
        $region38: #{tpu_custom_call.1} parent=35 // pred_check_branch
          %208 = sbr.rel (%p206) target = $region40
        $region39: #{tpu_custom_call.1} parent=35 // pred_region
          %s209 = sand.u32 %s25, 1
          %s210 = sand.u32 %s25, 1
          %s211 = smul.addr %s210, 64
          %s212 = scalar_lea.vmem [#allocation2], %s211
          %s213 = smul.u32 4, %s15
          %s214 = smul.addr %s213, 4
          %s215 = scalar_lea.vmem %s0, %s214
          // Predicated region
          $region41: #{tpu_custom_call.1} parent=39 // pred_check
            _
          $region42: #{tpu_custom_call.1} parent=39 // pred_check_branch
            %217 = sbr.rel (0) target = $region44
          $region43: #{tpu_custom_call.1} parent=39 // pred_region
            // Predicated region
            $region45: #{tpu_custom_call.1} parent=43 // pred_check
              _
            $region46: #{tpu_custom_call.1} parent=43 // pred_check_branch
              %219 = sbr.rel (0) target = $region48
            $region47: #{tpu_custom_call.1} parent=43 // pred_region
              loop: start=0, step=1, limit=1
              $region49: #{tpu_custom_call.1} parent=47 // loop_pre_header
                _
              $region50: #{tpu_custom_call.1} parent=47 // loop_header
                %s221 = sphi 0, %s225
                %p222 = scmp.ge.s32.totalorder %s221, 1
                %s226 = sphi %s215, %s215
                %s227 = sphi %s212, %s212
              $region51: #{tpu_custom_call.1} parent=47 // loop_header_branch
                %224 = sbr.rel (%p222) target = $region55
              $region52: #{tpu_custom_call.1} parent=47 // loop_body
                %v228 = vld [vmem:[%s226] sm:$0xff]
                %229 = vst [vmem:[%s227] sm:$0xff] %v228
                %v230 = vld [vmem:[%s226 + $0x8] sm:$0xff]
                %231 = vst [vmem:[%s227 + $0x8] sm:$0xff] %v230
                %v232 = vld [vmem:[%s226 + $0x20] sm:$0xff]
                %233 = vst [vmem:[%s227 + $0x10] sm:$0xff] %v232
                %v234 = vld [vmem:[%s226 + $0x28] sm:$0xff]
                %235 = vst [vmem:[%s227 + $0x18] sm:$0xff] %v234
                %v236 = vld [vmem:[%s226 + $0x40] sm:$0xff]
                %237 = vst [vmem:[%s227 + $0x20] sm:$0xff] %v236
                %v238 = vld [vmem:[%s226 + $0x48] sm:$0xff]
                %239 = vst [vmem:[%s227 + $0x28] sm:$0xff] %v238
                %v240 = vld [vmem:[%s226 + $0x60] sm:$0xff]
                %241 = vst [vmem:[%s227 + $0x30] sm:$0xff] %v240
                %v242 = vld [vmem:[%s226 + $0x68] sm:$0xff]
                %243 = vst [vmem:[%s227 + $0x38] sm:$0xff] %v242
              $region53: #{tpu_custom_call.1} parent=47 // loop_footer
                %s225 = sadd.s32 1, %s221
              $region54: #{tpu_custom_call.1} parent=47 // loop_footer_branch
                %220 = sbr.rel target = $region50
              $region55: #{tpu_custom_call.1} parent=47 // loop_exit
                _
            $region48: #{tpu_custom_call.1} parent=43 // pred_fallthru
              _
            // Predicated region
            $region56: #{tpu_custom_call.1} parent=43 // pred_check
              _
            $region57: #{tpu_custom_call.1} parent=43 // pred_check_branch
              %245 = sbr.rel target = $region59
            $region58: #{tpu_custom_call.1} parent=43 // pred_region
              _
            $region59: #{tpu_custom_call.1} parent=43 // pred_fallthru
              _
          $region44: #{tpu_custom_call.1} parent=39 // pred_fallthru
            _
          %246 = vnop
        $region40: #{tpu_custom_call.1} parent=35 // pred_fallthru
          _
      $region36: #{tpu_custom_call.1} parent=5 // pred_fallthru
        _
      %p247 = scmp.le.s32.totalorder 1, %s15
      %p248 = scmp.lt.s32.totalorder %s15, 3
      %p249 = pnand %p247, %p248
      %p250 = pneg %p249
      // Predicated region
      $region60: #{tpu_custom_call.1} parent=5 // pred_check
        _
      $region61: #{tpu_custom_call.1} parent=5 // pred_check_branch
        %252 = sbr.rel (%p249) target = $region63
      $region62: #{tpu_custom_call.1} parent=5 // pred_region
        %s253 = ssub.s32 %s15, 1
        %s254 = sand.u32 %s28, 1
        %s255 = sand.u32 %s28, 1
        %s256 = smul.addr %s255, 64
        %s257 = scalar_lea.vmem [#allocation2], %s256
        // Predicated region
        $region64: #{tpu_custom_call.1} parent=62 // pred_check
          %p258 = pneg %p41
        $region65: #{tpu_custom_call.1} parent=62 // pred_check_branch
          %260 = sbr.rel (%p258) target = $region67
        $region66: #{tpu_custom_call.1} parent=62 // pred_region
          _
        $region67: #{tpu_custom_call.1} parent=62 // pred_fallthru
          _
        %s261 = sand.u32 %s28, 1
        %s262 = sand.u32 %s28, 1
        %s263 = smul.addr %s262, 64
        %s264 = scalar_lea.vmem [#allocation2], %s263
        %p265 = pneg %p41
        %p266 = pneg %p38
        %p267 = pneg %p62
        %p268 = pneg %p59
        %p269 = pneg %p83
        %p270 = pneg %p80
        %p271 = pneg %p104
        %p272 = pneg %p101
        %p273 = pneg %p125
        %p274 = pneg %p122
        %p275 = pneg %p146
        %p276 = pneg %p143
        %p277 = pneg %p172
        %p278 = pneg %p169
        %s279 = sand.u32 %s159, 1
        %s280 = scalar_lea.sflag [#allocation4], %s279
        %s281 = sand.u32 %s159, 1
        %s282 = smul.addr %s281, 4
        %s283 = scalar_lea.vmem [#allocation3], %s282
        %s284 = smul.u32 4, %s20
        %s285 = smul.u32 4, %s20
        %v287 = vld [vmem:[%s1] sm:$0xf]
        %v288 = vld [vmem:[%s1 + $0x4] sm:$0xf]
        %v289 = vld [vmem:[%s1 + $0x8] sm:$0xf]
        %v290 = vld [vmem:[%s1 + $0xc] sm:$0xf]
        %v291 = vld [vmem:[%s1 + $0x10] sm:$0xf]
        %v292 = vld [vmem:[%s1 + $0x14] sm:$0xf]
        %v293 = vld [vmem:[%s1 + $0x18] sm:$0xf]
        %v294 = vld [vmem:[%s1 + $0x1c] sm:$0xf]
        %v295 = vld [vmem:[%s257] sm:$0xff]
        %v296 = vld [vmem:[%s257 + $0x8] sm:$0xff]
        %v297 = vld [vmem:[%s257 + $0x10] sm:$0xff]
        %v298 = vld [vmem:[%s257 + $0x18] sm:$0xff]
        %v299 = vld [vmem:[%s257 + $0x20] sm:$0xff]
        %v300 = vld [vmem:[%s257 + $0x28] sm:$0xff]
        %v301 = vld [vmem:[%s257 + $0x30] sm:$0xff]
        %v302 = vld [vmem:[%s257 + $0x38] sm:$0xff]
        %v303 = vld [vmem:[%s5] sm:$0xff]
        %v304 = vld [vmem:[%s5 + $0x8] sm:$0xff]
        %v305 = vld [vmem:[%s5 + $0x10] sm:$0xff]
        %v306 = vld [vmem:[%s5 + $0x18] sm:$0xff]
        %v307 = vld [vmem:[%s5 + $0x20] sm:$0xff]
        %v308 = vld [vmem:[%s5 + $0x28] sm:$0xff]
        %v309 = vld [vmem:[%s5 + $0x30] sm:$0xff]
        %v310 = vld [vmem:[%s5 + $0x38] sm:$0xff]
        %312 = vset.pattern.permute.xlu0 0
        %313 = vperm.xlu0 %312, %v303
        %v314 = vpop.permute.xlu0 %313
        %317 = vset.pattern.permute.xlu0 0
        %318 = vperm.xlu0 %317, %v304
        %v319 = vpop.permute.xlu0 %318
        %322 = vset.pattern.permute.xlu0 0
        %323 = vperm.xlu0 %322, %v305
        %v324 = vpop.permute.xlu0 %323
        %327 = vset.pattern.permute.xlu0 0
        %328 = vperm.xlu0 %327, %v306
        %v329 = vpop.permute.xlu0 %328
        %332 = vset.pattern.permute.xlu0 0
        %333 = vperm.xlu0 %332, %v307
        %v334 = vpop.permute.xlu0 %333
        %337 = vset.pattern.permute.xlu0 0
        %338 = vperm.xlu0 %337, %v308
        %v339 = vpop.permute.xlu0 %338
        %342 = vset.pattern.permute.xlu0 0
        %343 = vperm.xlu0 %342, %v309
        %v344 = vpop.permute.xlu0 %343
        %347 = vset.pattern.permute.xlu0 0
        %348 = vperm.xlu0 %347, %v310
        %v349 = vpop.permute.xlu0 %348
        %v359 = vunpack.c.l.b16 %v287
        %v360 = vunpack.c.l.b16 %v288
        %v361 = vunpack.c.l.b16 %v289
        %v362 = vunpack.c.l.b16 %v290
        %v363 = vunpack.c.l.b16 %v291
        %v364 = vunpack.c.l.b16 %v292
        %v365 = vunpack.c.l.b16 %v293
        %v366 = vunpack.c.l.b16 %v294
        %v367 = vpack.c.b16 %v360, %v359
        %v368 = vpack.c.b16 %v362, %v361
        %v369 = vpack.c.b16 %v364, %v363
        %v370 = vpack.c.b16 %v366, %v365
        %v379 = vunpack.c.l.b16 %v295
        %v380 = vunpack.c.h.b16 %v295
        %v381 = vunpack.c.l.b16 %v296
        %v382 = vunpack.c.h.b16 %v296
        %v383 = vunpack.c.l.b16 %v297
        %v384 = vunpack.c.h.b16 %v297
        %v385 = vunpack.c.l.b16 %v298
        %v386 = vunpack.c.h.b16 %v298
        %v387 = vunpack.c.l.b16 %v299
        %v388 = vunpack.c.h.b16 %v299
        %v389 = vunpack.c.l.b16 %v300
        %v390 = vunpack.c.h.b16 %v300
        %v391 = vunpack.c.l.b16 %v301
        %v392 = vunpack.c.h.b16 %v301
        %v393 = vunpack.c.l.b16 %v302
        %v394 = vunpack.c.h.b16 %v302
        %v395 = vpack.c.b16 %v383, %v379
        %v396 = vpack.c.b16 %v384, %v380
        %v397 = vpack.c.b16 %v385, %v381
        %v398 = vpack.c.b16 %v386, %v382
        %v399 = vpack.c.b16 %v391, %v387
        %v400 = vpack.c.b16 %v392, %v388
        %v401 = vpack.c.b16 %v393, %v389
        %v402 = vpack.c.b16 %v394, %v390
        %vm411 = vcmask 261120
        %v413 = vsel %vm411, %v367, 0
        %v416 = vsel %vm411, %v368, 0
        %v419 = vsel %vm411, %v369, 0
        %v422 = vsel %vm411, %v370, 0
        %424 = vmatprep.subr.bf16.mxu0 0
        %425 = vmatpush1.bf16.msra.mxu0 0
        %426 = vmatprep.subr.bf16.mxu0 0
        %427 = vmatpush1.bf16.msra.mxu0 0
        %428 = vmatprep.subr.bf16.mxu0 0
        %429 = vmatpush1.bf16.msra.mxu0 0
        %430 = vmatprep.subr.bf16.mxu0 0
        %431 = vmatpush1.bf16.msra.mxu0 0
        %432 = vmatprep.subr.bf16.mxu0 0
        %433 = vmatpush1.bf16.msra.mxu0 0
        %434 = vmatprep.subr.bf16.mxu0 0
        %435 = vmatpush1.bf16.msra.mxu0 0
        %436 = vmatprep.subr.bf16.mxu0 %v400
        %437 = vmatpush1.bf16.msra.mxu0 %v399
        %438 = vmatprep.subr.bf16.mxu0 %v396
        %439 = vmatpush1.bf16.msra.mxu0 %v395
        %440 = vmatprep.subr.bf16.mxu0 0
        %441 = vmatpush2.bf16.msra.mxu0 0
        %442 = vmatprep.subr.bf16.mxu0 0
        %443 = vmatpush2.bf16.msra.mxu0 0
        %444 = vmatprep.subr.bf16.mxu0 0
        %445 = vmatpush2.bf16.msra.mxu0 0
        %446 = vmatprep.subr.bf16.mxu0 0
        %447 = vmatpush2.bf16.msra.mxu0 0
        %448 = vmatprep.subr.bf16.mxu0 0
        %449 = vmatpush2.bf16.msra.mxu0 0
        %450 = vmatprep.subr.bf16.mxu0 0
        %451 = vmatpush2.bf16.msra.mxu0 0
        %452 = vmatprep.subr.bf16.mxu0 0
        %453 = vmatpush2.bf16.msra.mxu0 0
        %454 = vmatprep.subr.bf16.mxu0 0
        %455 = vmatpush2.bf16.msra.mxu0 0
        %456 = vmatprep.mubr.bf16.mxu0 0
        %457 = vmatmul.mubr.bf16.gmra.mxu0 %v413
        %v458 = vpop.f32.mrf.mxu0
        %v459 = vadd.f32 %v314, %v458
        %v460 = vpop.f32.mrf.mxu0
        %v461 = vadd.f32 %v314, %v460
        %v462 = vpop.f32.mrf.mxu0
        %v463 = vadd.f32 %v319, %v462
        %v464 = vpop.f32.mrf.mxu0
        %v465 = vadd.f32 %v319, %v464
        %466 = vmatprep.mubr.bf16.mxu0 0
        %467 = vmatmul.mubr.bf16.gmra.mxu0 %v416
        %v468 = vpop.f32.mrf.mxu0
        %v469 = vadd.f32 %v324, %v468
        %v470 = vpop.f32.mrf.mxu0
        %v471 = vadd.f32 %v324, %v470
        %v472 = vpop.f32.mrf.mxu0
        %v473 = vadd.f32 %v329, %v472
        %v474 = vpop.f32.mrf.mxu0
        %v475 = vadd.f32 %v329, %v474
        %476 = vmatprep.mubr.bf16.mxu0 0
        %477 = vmatmul.mubr.bf16.gmra.mxu0 %v419
        %v478 = vpop.f32.mrf.mxu0
        %v479 = vadd.f32 %v334, %v478
        %v480 = vpop.f32.mrf.mxu0
        %v481 = vadd.f32 %v334, %v480
        %v482 = vpop.f32.mrf.mxu0
        %v483 = vadd.f32 %v339, %v482
        %v484 = vpop.f32.mrf.mxu0
        %v485 = vadd.f32 %v339, %v484
        %486 = vmatprep.mubr.bf16.mxu0 0
        %487 = vmatmul.mubr.bf16.gmra.mxu0 %v422
        %v488 = vpop.f32.mrf.mxu0
        %v489 = vadd.f32 %v344, %v488
        %v490 = vpop.f32.mrf.mxu0
        %v491 = vadd.f32 %v344, %v490
        %v492 = vpop.f32.mrf.mxu0
        %v493 = vadd.f32 %v349, %v492
        %v494 = vpop.f32.mrf.mxu0
        %v495 = vadd.f32 %v349, %v494
        %496 = vdwg.mxu0
        %497 = vmatprep.subr.bf16.mxu0 0
        %498 = vmatpush1.bf16.msra.mxu0 0
        %499 = vmatprep.subr.bf16.mxu0 0
        %500 = vmatpush1.bf16.msra.mxu0 0
        %501 = vmatprep.subr.bf16.mxu0 0
        %502 = vmatpush1.bf16.msra.mxu0 0
        %503 = vmatprep.subr.bf16.mxu0 0
        %504 = vmatpush1.bf16.msra.mxu0 0
        %505 = vmatprep.subr.bf16.mxu0 0
        %506 = vmatpush1.bf16.msra.mxu0 0
        %507 = vmatprep.subr.bf16.mxu0 0
        %508 = vmatpush1.bf16.msra.mxu0 0
        %509 = vmatprep.subr.bf16.mxu0 %v402
        %510 = vmatpush1.bf16.msra.mxu0 %v401
        %511 = vmatprep.subr.bf16.mxu0 %v398
        %512 = vmatpush1.bf16.msra.mxu0 %v397
        %513 = vmatprep.subr.bf16.mxu0 0
        %514 = vmatpush2.bf16.msra.mxu0 0
        %515 = vmatprep.subr.bf16.mxu0 0
        %516 = vmatpush2.bf16.msra.mxu0 0
        %517 = vmatprep.subr.bf16.mxu0 0
        %518 = vmatpush2.bf16.msra.mxu0 0
        %519 = vmatprep.subr.bf16.mxu0 0
        %520 = vmatpush2.bf16.msra.mxu0 0
        %521 = vmatprep.subr.bf16.mxu0 0
        %522 = vmatpush2.bf16.msra.mxu0 0
        %523 = vmatprep.subr.bf16.mxu0 0
        %524 = vmatpush2.bf16.msra.mxu0 0
        %525 = vmatprep.subr.bf16.mxu0 0
        %526 = vmatpush2.bf16.msra.mxu0 0
        %527 = vmatprep.subr.bf16.mxu0 0
        %528 = vmatpush2.bf16.msra.mxu0 0
        %529 = vmatprep.mubr.bf16.mxu0 0
        %530 = vmatmul.mubr.bf16.gmra.mxu0 %v413
        %v531 = vpop.f32.mrf.mxu0
        %v532 = vadd.f32 %v314, %v531
        %v533 = vpop.f32.mrf.mxu0
        %v534 = vadd.f32 %v314, %v533
        %v535 = vpop.f32.mrf.mxu0
        %v536 = vadd.f32 %v319, %v535
        %v537 = vpop.f32.mrf.mxu0
        %v538 = vadd.f32 %v319, %v537
        %539 = vmatprep.mubr.bf16.mxu0 0
        %540 = vmatmul.mubr.bf16.gmra.mxu0 %v416
        %v541 = vpop.f32.mrf.mxu0
        %v542 = vadd.f32 %v324, %v541
        %v543 = vpop.f32.mrf.mxu0
        %v544 = vadd.f32 %v324, %v543
        %v545 = vpop.f32.mrf.mxu0
        %v546 = vadd.f32 %v329, %v545
        %v547 = vpop.f32.mrf.mxu0
        %v548 = vadd.f32 %v329, %v547
        %549 = vmatprep.mubr.bf16.mxu0 0
        %550 = vmatmul.mubr.bf16.gmra.mxu0 %v419
        %v551 = vpop.f32.mrf.mxu0
        %v552 = vadd.f32 %v334, %v551
        %v553 = vpop.f32.mrf.mxu0
        %v554 = vadd.f32 %v334, %v553
        %v555 = vpop.f32.mrf.mxu0
        %v556 = vadd.f32 %v339, %v555
        %v557 = vpop.f32.mrf.mxu0
        %v558 = vadd.f32 %v339, %v557
        %559 = vmatprep.mubr.bf16.mxu0 0
        %560 = vmatmul.mubr.bf16.gmra.mxu0 %v422
        %v561 = vpop.f32.mrf.mxu0
        %v562 = vadd.f32 %v344, %v561
        %v563 = vpop.f32.mrf.mxu0
        %v564 = vadd.f32 %v344, %v563
        %v565 = vpop.f32.mrf.mxu0
        %v566 = vadd.f32 %v349, %v565
        %v567 = vpop.f32.mrf.mxu0
        %v568 = vadd.f32 %v349, %v567
        %569 = vdwg.mxu0
        %v570 = vmax.f32 %v459, 0.0
        %v571 = vmax.f32 %v461, 0.0
        %v572 = vmax.f32 %v532, 0.0
        %v573 = vmax.f32 %v534, 0.0
        %v574 = vmax.f32 %v463, 0.0
        %v575 = vmax.f32 %v465, 0.0
        %v576 = vmax.f32 %v536, 0.0
        %v577 = vmax.f32 %v538, 0.0
        %v578 = vmax.f32 %v469, 0.0
        %v579 = vmax.f32 %v471, 0.0
        %v580 = vmax.f32 %v542, 0.0
        %v581 = vmax.f32 %v544, 0.0
        %v582 = vmax.f32 %v473, 0.0
        %v583 = vmax.f32 %v475, 0.0
        %v584 = vmax.f32 %v546, 0.0
        %v585 = vmax.f32 %v548, 0.0
        %v586 = vmax.f32 %v479, 0.0
        %v587 = vmax.f32 %v481, 0.0
        %v588 = vmax.f32 %v552, 0.0
        %v589 = vmax.f32 %v554, 0.0
        %v590 = vmax.f32 %v483, 0.0
        %v591 = vmax.f32 %v485, 0.0
        %v592 = vmax.f32 %v556, 0.0
        %v593 = vmax.f32 %v558, 0.0
        %v594 = vmax.f32 %v489, 0.0
        %v595 = vmax.f32 %v491, 0.0
        %v596 = vmax.f32 %v562, 0.0
        %v597 = vmax.f32 %v564, 0.0
        %v598 = vmax.f32 %v493, 0.0
        %v599 = vmax.f32 %v495, 0.0
        %v600 = vmax.f32 %v566, 0.0
        %v601 = vmax.f32 %v568, 0.0
        %v602 = vld [vmem:[%s2] sm:$0xf]
        %v603 = vld [vmem:[%s2 + $0x4] sm:$0xf]
        %v604 = vld [vmem:[%s2 + $0x8] sm:$0xf]
        %v605 = vld [vmem:[%s2 + $0xc] sm:$0xf]
        %v606 = vpack.c.bf16 %v574, %v570
        %v607 = vpack.c.bf16 %v575, %v571
        %v608 = vpack.c.bf16 %v576, %v572
        %v609 = vpack.c.bf16 %v577, %v573
        %v610 = vpack.c.bf16 %v582, %v578
        %v611 = vpack.c.bf16 %v583, %v579
        %v612 = vpack.c.bf16 %v584, %v580
        %v613 = vpack.c.bf16 %v585, %v581
        %v614 = vpack.c.bf16 %v590, %v586
        %v615 = vpack.c.bf16 %v591, %v587
        %v616 = vpack.c.bf16 %v592, %v588
        %v617 = vpack.c.bf16 %v593, %v589
        %v618 = vpack.c.bf16 %v598, %v594
        %v619 = vpack.c.bf16 %v599, %v595
        %v620 = vpack.c.bf16 %v600, %v596
        %v621 = vpack.c.bf16 %v601, %v597
        %v622 = vld [vmem:[%s5 + $0x40] sm:$0xff]
        %v623 = vld [vmem:[%s5 + $0x48] sm:$0xff]
        %v624 = vld [vmem:[%s5 + $0x50] sm:$0xff]
        %v625 = vld [vmem:[%s5 + $0x58] sm:$0xff]
        %627 = vset.pattern.permute.xlu0 0
        %628 = vperm.xlu0 %627, %v622
        %v629 = vpop.permute.xlu0 %628
        %632 = vset.pattern.permute.xlu0 0
        %633 = vperm.xlu0 %632, %v623
        %v634 = vpop.permute.xlu0 %633
        %637 = vset.pattern.permute.xlu0 0
        %638 = vperm.xlu0 %637, %v624
        %v639 = vpop.permute.xlu0 %638
        %642 = vset.pattern.permute.xlu0 0
        %643 = vperm.xlu0 %642, %v625
        %v644 = vpop.permute.xlu0 %643
        %v650 = vunpack.c.l.b16 %v602
        %v651 = vunpack.c.l.b16 %v603
        %v652 = vunpack.c.l.b16 %v604
        %v653 = vunpack.c.l.b16 %v605
        %v654 = vpack.c.b16 %v651, %v650
        %v655 = vpack.c.b16 %v653, %v652
        %vm656 = vcmask 523264
        %v658 = vsel %vm656, %v654, 0
        %v661 = vsel %vm656, %v655, 0
        %663 = vmatprep.subr.bf16.mxu0 0
        %664 = vmatpush1.bf16.msra.mxu0 0
        %665 = vmatprep.subr.bf16.mxu0 0
        %666 = vmatpush1.bf16.msra.mxu0 0
        %667 = vmatprep.subr.bf16.mxu0 0
        %668 = vmatpush1.bf16.msra.mxu0 0
        %669 = vmatprep.subr.bf16.mxu0 0
        %670 = vmatpush1.bf16.msra.mxu0 0
        %671 = vmatprep.subr.bf16.mxu0 %v619
        %672 = vmatpush1.bf16.msra.mxu0 %v618
        %673 = vmatprep.subr.bf16.mxu0 %v615
        %674 = vmatpush1.bf16.msra.mxu0 %v614
        %675 = vmatprep.subr.bf16.mxu0 %v611
        %676 = vmatpush1.bf16.msra.mxu0 %v610
        %677 = vmatprep.subr.bf16.mxu0 %v607
        %678 = vmatpush1.bf16.msra.mxu0 %v606
        %679 = vmatprep.subr.bf16.mxu0 0
        %680 = vmatpush2.bf16.msra.mxu0 0
        %681 = vmatprep.subr.bf16.mxu0 0
        %682 = vmatpush2.bf16.msra.mxu0 0
        %683 = vmatprep.subr.bf16.mxu0 0
        %684 = vmatpush2.bf16.msra.mxu0 0
        %685 = vmatprep.subr.bf16.mxu0 0
        %686 = vmatpush2.bf16.msra.mxu0 0
        %687 = vmatprep.subr.bf16.mxu0 0
        %688 = vmatpush2.bf16.msra.mxu0 0
        %689 = vmatprep.subr.bf16.mxu0 0
        %690 = vmatpush2.bf16.msra.mxu0 0
        %691 = vmatprep.subr.bf16.mxu0 0
        %692 = vmatpush2.bf16.msra.mxu0 0
        %693 = vmatprep.subr.bf16.mxu0 0
        %694 = vmatpush2.bf16.msra.mxu0 0
        %695 = vmatprep.mubr.bf16.mxu0 0
        %696 = vmatmul.mubr.bf16.gmra.mxu0 %v658
        %v697 = vpop.f32.mrf.mxu0
        %v698 = vadd.f32 %v629, %v697
        %v699 = vpop.f32.mrf.mxu0
        %v700 = vadd.f32 %v629, %v699
        %v701 = vpop.f32.mrf.mxu0
        %v702 = vadd.f32 %v634, %v701
        %v703 = vpop.f32.mrf.mxu0
        %v704 = vadd.f32 %v634, %v703
        %705 = vmatprep.mubr.bf16.mxu0 0
        %706 = vmatmul.mubr.bf16.gmra.mxu0 %v661
        %v707 = vpop.f32.mrf.mxu0
        %v708 = vadd.f32 %v639, %v707
        %v709 = vpop.f32.mrf.mxu0
        %v710 = vadd.f32 %v639, %v709
        %v711 = vpop.f32.mrf.mxu0
        %v712 = vadd.f32 %v644, %v711
        %v713 = vpop.f32.mrf.mxu0
        %v714 = vadd.f32 %v644, %v713
        %715 = vdwg.mxu0
        %716 = vmatprep.subr.bf16.mxu0 0
        %717 = vmatpush1.bf16.msra.mxu0 0
        %718 = vmatprep.subr.bf16.mxu0 0
        %719 = vmatpush1.bf16.msra.mxu0 0
        %720 = vmatprep.subr.bf16.mxu0 0
        %721 = vmatpush1.bf16.msra.mxu0 0
        %722 = vmatprep.subr.bf16.mxu0 0
        %723 = vmatpush1.bf16.msra.mxu0 0
        %724 = vmatprep.subr.bf16.mxu0 %v621
        %725 = vmatpush1.bf16.msra.mxu0 %v620
        %726 = vmatprep.subr.bf16.mxu0 %v617
        %727 = vmatpush1.bf16.msra.mxu0 %v616
        %728 = vmatprep.subr.bf16.mxu0 %v613
        %729 = vmatpush1.bf16.msra.mxu0 %v612
        %730 = vmatprep.subr.bf16.mxu0 %v609
        %731 = vmatpush1.bf16.msra.mxu0 %v608
        %732 = vmatprep.subr.bf16.mxu0 0
        %733 = vmatpush2.bf16.msra.mxu0 0
        %734 = vmatprep.subr.bf16.mxu0 0
        %735 = vmatpush2.bf16.msra.mxu0 0
        %736 = vmatprep.subr.bf16.mxu0 0
        %737 = vmatpush2.bf16.msra.mxu0 0
        %738 = vmatprep.subr.bf16.mxu0 0
        %739 = vmatpush2.bf16.msra.mxu0 0
        %740 = vmatprep.subr.bf16.mxu0 0
        %741 = vmatpush2.bf16.msra.mxu0 0
        %742 = vmatprep.subr.bf16.mxu0 0
        %743 = vmatpush2.bf16.msra.mxu0 0
        %744 = vmatprep.subr.bf16.mxu0 0
        %745 = vmatpush2.bf16.msra.mxu0 0
        %746 = vmatprep.subr.bf16.mxu0 0
        %747 = vmatpush2.bf16.msra.mxu0 0
        %748 = vmatprep.mubr.bf16.mxu0 0
        %749 = vmatmul.mubr.bf16.gmra.mxu0 %v658
        %v750 = vpop.f32.mrf.mxu0
        %v751 = vadd.f32 %v629, %v750
        %v752 = vpop.f32.mrf.mxu0
        %v753 = vadd.f32 %v629, %v752
        %v754 = vpop.f32.mrf.mxu0
        %v755 = vadd.f32 %v634, %v754
        %v756 = vpop.f32.mrf.mxu0
        %v757 = vadd.f32 %v634, %v756
        %758 = vmatprep.mubr.bf16.mxu0 0
        %759 = vmatmul.mubr.bf16.gmra.mxu0 %v661
        %v760 = vpop.f32.mrf.mxu0
        %v761 = vadd.f32 %v639, %v760
        %v762 = vpop.f32.mrf.mxu0
        %v763 = vadd.f32 %v639, %v762
        %v764 = vpop.f32.mrf.mxu0
        %v765 = vadd.f32 %v644, %v764
        %v766 = vpop.f32.mrf.mxu0
        %v767 = vadd.f32 %v644, %v766
        %768 = vdwg.mxu0
        %v769 = vmax.f32 %v698, 0.0
        %v770 = vmax.f32 %v700, 0.0
        %v771 = vmax.f32 %v751, 0.0
        %v772 = vmax.f32 %v753, 0.0
        %v773 = vmax.f32 %v702, 0.0
        %v774 = vmax.f32 %v704, 0.0
        %v775 = vmax.f32 %v755, 0.0
        %v776 = vmax.f32 %v757, 0.0
        %v777 = vmax.f32 %v708, 0.0
        %v778 = vmax.f32 %v710, 0.0
        %v779 = vmax.f32 %v761, 0.0
        %v780 = vmax.f32 %v763, 0.0
        %v781 = vmax.f32 %v712, 0.0
        %v782 = vmax.f32 %v714, 0.0
        %v783 = vmax.f32 %v765, 0.0
        %v784 = vmax.f32 %v767, 0.0
        %v785 = vld [vmem:[%s3] sm:$0xf]
        %v786 = vld [vmem:[%s3 + $0x4] sm:$0xf]
        %v787 = vpack.c.bf16 %v773, %v769
        %v788 = vpack.c.bf16 %v774, %v770
        %v789 = vpack.c.bf16 %v775, %v771
        %v790 = vpack.c.bf16 %v776, %v772
        %v791 = vpack.c.bf16 %v781, %v777
        %v792 = vpack.c.bf16 %v782, %v778
        %v793 = vpack.c.bf16 %v783, %v779
        %v794 = vpack.c.bf16 %v784, %v780
        %v795 = vld [vmem:[%s5 + $0x60] sm:$0xff]
        %v796 = vld [vmem:[%s5 + $0x68] sm:$0xff]
        %798 = vset.pattern.permute.xlu0 0
        %799 = vperm.xlu0 %798, %v795
        %v800 = vpop.permute.xlu0 %799
        %803 = vset.pattern.permute.xlu0 0
        %804 = vperm.xlu0 %803, %v796
        %v805 = vpop.permute.xlu0 %804
        %v809 = vunpack.c.l.b16 %v785
        %v810 = vunpack.c.l.b16 %v786
        %v811 = vpack.c.b16 %v810, %v809
        %v813 = vsel %vm411, %v811, 0
        %815 = vmatprep.subr.bf16.mxu0 0
        %816 = vmatpush1.bf16.msra.mxu0 0
        %817 = vmatprep.subr.bf16.mxu0 0
        %818 = vmatpush1.bf16.msra.mxu0 0
        %819 = vmatprep.subr.bf16.mxu0 0
        %820 = vmatpush1.bf16.msra.mxu0 0
        %821 = vmatprep.subr.bf16.mxu0 0
        %822 = vmatpush1.bf16.msra.mxu0 0
        %823 = vmatprep.subr.bf16.mxu0 0
        %824 = vmatpush1.bf16.msra.mxu0 0
        %825 = vmatprep.subr.bf16.mxu0 0
        %826 = vmatpush1.bf16.msra.mxu0 0
        %827 = vmatprep.subr.bf16.mxu0 %v792
        %828 = vmatpush1.bf16.msra.mxu0 %v791
        %829 = vmatprep.subr.bf16.mxu0 %v788
        %830 = vmatpush1.bf16.msra.mxu0 %v787
        %831 = vmatprep.subr.bf16.mxu0 0
        %832 = vmatpush2.bf16.msra.mxu0 0
        %833 = vmatprep.subr.bf16.mxu0 0
        %834 = vmatpush2.bf16.msra.mxu0 0
        %835 = vmatprep.subr.bf16.mxu0 0
        %836 = vmatpush2.bf16.msra.mxu0 0
        %837 = vmatprep.subr.bf16.mxu0 0
        %838 = vmatpush2.bf16.msra.mxu0 0
        %839 = vmatprep.subr.bf16.mxu0 0
        %840 = vmatpush2.bf16.msra.mxu0 0
        %841 = vmatprep.subr.bf16.mxu0 0
        %842 = vmatpush2.bf16.msra.mxu0 0
        %843 = vmatprep.subr.bf16.mxu0 0
        %844 = vmatpush2.bf16.msra.mxu0 0
        %845 = vmatprep.subr.bf16.mxu0 0
        %846 = vmatpush2.bf16.msra.mxu0 0
        %847 = vmatprep.mubr.bf16.mxu0 0
        %848 = vmatmul.mubr.bf16.gmra.mxu0 %v813
        %v849 = vpop.f32.mrf.mxu0
        %v850 = vadd.f32 %v800, %v849
        %v851 = vpop.f32.mrf.mxu0
        %v852 = vadd.f32 %v800, %v851
        %v853 = vpop.f32.mrf.mxu0
        %v854 = vadd.f32 %v805, %v853
        %v855 = vpop.f32.mrf.mxu0
        %v856 = vadd.f32 %v805, %v855
        %857 = vdwg.mxu0
        %858 = vmatprep.subr.bf16.mxu0 0
        %859 = vmatpush1.bf16.msra.mxu0 0
        %860 = vmatprep.subr.bf16.mxu0 0
        %861 = vmatpush1.bf16.msra.mxu0 0
        %862 = vmatprep.subr.bf16.mxu0 0
        %863 = vmatpush1.bf16.msra.mxu0 0
        %864 = vmatprep.subr.bf16.mxu0 0
        %865 = vmatpush1.bf16.msra.mxu0 0
        %866 = vmatprep.subr.bf16.mxu0 0
        %867 = vmatpush1.bf16.msra.mxu0 0
        %868 = vmatprep.subr.bf16.mxu0 0
        %869 = vmatpush1.bf16.msra.mxu0 0
        %870 = vmatprep.subr.bf16.mxu0 %v794
        %871 = vmatpush1.bf16.msra.mxu0 %v793
        %872 = vmatprep.subr.bf16.mxu0 %v790
        %873 = vmatpush1.bf16.msra.mxu0 %v789
        %874 = vmatprep.subr.bf16.mxu0 0
        %875 = vmatpush2.bf16.msra.mxu0 0
        %876 = vmatprep.subr.bf16.mxu0 0
        %877 = vmatpush2.bf16.msra.mxu0 0
        %878 = vmatprep.subr.bf16.mxu0 0
        %879 = vmatpush2.bf16.msra.mxu0 0
        %880 = vmatprep.subr.bf16.mxu0 0
        %881 = vmatpush2.bf16.msra.mxu0 0
        %882 = vmatprep.subr.bf16.mxu0 0
        %883 = vmatpush2.bf16.msra.mxu0 0
        %884 = vmatprep.subr.bf16.mxu0 0
        %885 = vmatpush2.bf16.msra.mxu0 0
        %886 = vmatprep.subr.bf16.mxu0 0
        %887 = vmatpush2.bf16.msra.mxu0 0
        %888 = vmatprep.subr.bf16.mxu0 0
        %889 = vmatpush2.bf16.msra.mxu0 0
        %890 = vmatprep.mubr.bf16.mxu0 0
        %891 = vmatmul.mubr.bf16.gmra.mxu0 %v813
        %v892 = vpop.f32.mrf.mxu0
        %v893 = vadd.f32 %v800, %v892
        %v894 = vpop.f32.mrf.mxu0
        %v895 = vadd.f32 %v800, %v894
        %v896 = vpop.f32.mrf.mxu0
        %v897 = vadd.f32 %v805, %v896
        %v898 = vpop.f32.mrf.mxu0
        %v899 = vadd.f32 %v805, %v898
        %900 = vdwg.mxu0
        %v901 = vmax.f32 %v850, 0.0
        %v902 = vmax.f32 %v852, 0.0
        %v903 = vmax.f32 %v893, 0.0
        %v904 = vmax.f32 %v895, 0.0
        %v905 = vmax.f32 %v854, 0.0
        %v906 = vmax.f32 %v856, 0.0
        %v907 = vmax.f32 %v897, 0.0
        %v908 = vmax.f32 %v899, 0.0
        %v909 = vld [vmem:[%s4] sm:$0x1]
        %v910 = vpack.c.bf16 %v905, %v901
        %v911 = vpack.c.bf16 %v906, %v902
        %v912 = vpack.c.bf16 %v907, %v903
        %v913 = vpack.c.bf16 %v908, %v904
        %v914 = vld [vmem:[%s5 + $0x70] sm:$0x1]
        %916 = vset.pattern.permute.xlu0 0
        %917 = vperm.xlu0 %916, %v914
        %v918 = vpop.permute.xlu0 %917
        %vm920 = vcmask 130048
        %v922 = vsel %vm920, %v909, 0
        %924 = vmatprep.subr.bf16.mxu0 0
        %925 = vmatpush1.bf16.msra.mxu0 0
        %926 = vmatprep.subr.bf16.mxu0 0
        %927 = vmatpush1.bf16.msra.mxu0 0
        %928 = vmatprep.subr.bf16.mxu0 0
        %929 = vmatpush1.bf16.msra.mxu0 0
        %930 = vmatprep.subr.bf16.mxu0 0
        %931 = vmatpush1.bf16.msra.mxu0 0
        %932 = vmatprep.subr.bf16.mxu0 0
        %933 = vmatpush1.bf16.msra.mxu0 0
        %934 = vmatprep.subr.bf16.mxu0 0
        %935 = vmatpush1.bf16.msra.mxu0 0
        %936 = vmatprep.subr.bf16.mxu0 0
        %937 = vmatpush1.bf16.msra.mxu0 0
        %938 = vmatprep.subr.bf16.mxu0 %v911
        %939 = vmatpush1.bf16.msra.mxu0 %v910
        %940 = vmatprep.subr.bf16.mxu0 0
        %941 = vmatpush2.bf16.msra.mxu0 0
        %942 = vmatprep.subr.bf16.mxu0 0
        %943 = vmatpush2.bf16.msra.mxu0 0
        %944 = vmatprep.subr.bf16.mxu0 0
        %945 = vmatpush2.bf16.msra.mxu0 0
        %946 = vmatprep.subr.bf16.mxu0 0
        %947 = vmatpush2.bf16.msra.mxu0 0
        %948 = vmatprep.subr.bf16.mxu0 0
        %949 = vmatpush2.bf16.msra.mxu0 0
        %950 = vmatprep.subr.bf16.mxu0 0
        %951 = vmatpush2.bf16.msra.mxu0 0
        %952 = vmatprep.subr.bf16.mxu0 0
        %953 = vmatpush2.bf16.msra.mxu0 0
        %954 = vmatprep.subr.bf16.mxu0 0
        %955 = vmatpush2.bf16.msra.mxu0 0
        %956 = vmatprep.mubr.bf16.mxu0 0
        %957 = vmatmul.mubr.bf16.gmra.mxu0 %v922
        %v958 = vpop.f32.mrf.mxu0
        %v959 = vadd.f32 %v918, %v958
        %v960 = vpop.f32.mrf.mxu0
        %v961 = vadd.f32 %v918, %v960
        %v962 = vpop.f32.mrf.mxu0
        %v963 = vpop.f32.mrf.mxu0
        %964 = vdwg.mxu0
        %965 = vmatprep.subr.bf16.mxu0 0
        %966 = vmatpush1.bf16.msra.mxu0 0
        %967 = vmatprep.subr.bf16.mxu0 0
        %968 = vmatpush1.bf16.msra.mxu0 0
        %969 = vmatprep.subr.bf16.mxu0 0
        %970 = vmatpush1.bf16.msra.mxu0 0
        %971 = vmatprep.subr.bf16.mxu0 0
        %972 = vmatpush1.bf16.msra.mxu0 0
        %973 = vmatprep.subr.bf16.mxu0 0
        %974 = vmatpush1.bf16.msra.mxu0 0
        %975 = vmatprep.subr.bf16.mxu0 0
        %976 = vmatpush1.bf16.msra.mxu0 0
        %977 = vmatprep.subr.bf16.mxu0 0
        %978 = vmatpush1.bf16.msra.mxu0 0
        %979 = vmatprep.subr.bf16.mxu0 %v913
        %980 = vmatpush1.bf16.msra.mxu0 %v912
        %981 = vmatprep.subr.bf16.mxu0 0
        %982 = vmatpush2.bf16.msra.mxu0 0
        %983 = vmatprep.subr.bf16.mxu0 0
        %984 = vmatpush2.bf16.msra.mxu0 0
        %985 = vmatprep.subr.bf16.mxu0 0
        %986 = vmatpush2.bf16.msra.mxu0 0
        %987 = vmatprep.subr.bf16.mxu0 0
        %988 = vmatpush2.bf16.msra.mxu0 0
        %989 = vmatprep.subr.bf16.mxu0 0
        %990 = vmatpush2.bf16.msra.mxu0 0
        %991 = vmatprep.subr.bf16.mxu0 0
        %992 = vmatpush2.bf16.msra.mxu0 0
        %993 = vmatprep.subr.bf16.mxu0 0
        %994 = vmatpush2.bf16.msra.mxu0 0
        %995 = vmatprep.subr.bf16.mxu0 0
        %996 = vmatpush2.bf16.msra.mxu0 0
        %997 = vmatprep.mubr.bf16.mxu0 0
        %998 = vmatmul.mubr.bf16.gmra.mxu0 %v922
        %v999 = vpop.f32.mrf.mxu0
        %v1000 = vadd.f32 %v918, %v999
        %v1001 = vpop.f32.mrf.mxu0
        %v1002 = vadd.f32 %v918, %v1001
        %v1003 = vpop.f32.mrf.mxu0
        %v1004 = vpop.f32.mrf.mxu0
        %1005 = vdwg.mxu0
        %v1006 = vxor.u32 %v959, 2147483648
        %v1007 = vxor.u32 %v961, 2147483648
        %v1008 = vxor.u32 %v1000, 2147483648
        %v1009 = vxor.u32 %v1002, 2147483648
        %v1010 = vmul.f32 %v1006, 1.442695
        %v1011 = vpow.pop %v1010
        %v1012 = vmul.f32 %v1007, 1.442695
        %v1013 = vpow.pop %v1012
        %v1014 = vmul.f32 %v1008, 1.442695
        %v1015 = vpow.pop %v1014
        %v1016 = vmul.f32 %v1009, 1.442695
        %v1017 = vpow.pop %v1016
        %v1018 = vadd.f32 %v1011, 1.0
        %v1019 = vadd.f32 %v1013, 1.0
        %v1020 = vadd.f32 %v1015, 1.0
        %v1021 = vadd.f32 %v1017, 1.0
        %v1022 = vrcp.pop %v1018
        %v1023 = vmul.f32 1.0, %v1022
        %v1024 = vrcp.pop %v1019
        %v1025 = vmul.f32 1.0, %v1024
        %v1026 = vrcp.pop %v1020
        %v1027 = vmul.f32 1.0, %v1026
        %v1028 = vrcp.pop %v1021
        %v1029 = vmul.f32 1.0, %v1028
        %v1034 = vcombine.low %v1023, %v1025
        %v1035 = vcombine.low %v1027, %v1029
        %v1037 = vunpack.c.l.s4 1966171168
        %v1038 = vunpack.c.0.s8 %v1037
        %v1039 = vlaneseq
        %v1040 = vshrl.u32 %v1039, 7
        %v1041 = vsub.s32 %v1038, %v1040
        %v1042 = vrot.slane %v1034, %v1041
        %v1044 = vunpack.c.l.s4 1966171168
        %v1045 = vunpack.c.0.s8 %v1044
        %v1046 = vlaneseq
        %v1047 = vshrl.u32 %v1046, 7
        %v1048 = vsub.s32 %v1045, %v1047
        %v1049 = vrot.slane %v1035, %v1048
        %v1050 = vcombine.low %v1042, %v1049
        %v1052 = vunpack.c.l.s4 1966171168
        %v1053 = vunpack.c.0.s8 %v1052
        %v1054 = vlaneseq
        %v1055 = vshrl.u32 %v1054, 7
        %v1056 = vsub.s32 %v1053, %v1055
        %v1057 = vrot.slane %v1050, %v1056
        %v1059 = vlaneseq
        %vm1060 = vcmp.ge.s32.totalorder %v1059, 0
        %vm1061 = vcmp.lt.s32.totalorder %v1059, 512
        %vm1062 = vmand %vm1060, %vm1061
        %1063 = vst.msk [vmem:[%s283] sm:$0xf] %vm1062, %v1057
        %s1064 = sand.u32 %s159, 1
        %s1065 = scalar_lea.sflag [#allocation4], %s1064
        %s1066 = sand.u32 %s159, 1
        %s1067 = smul.addr %s1066, 4
        %s1068 = scalar_lea.vmem [#allocation3], %s1067
        // Predicated region
        $region68: #{tpu_custom_call.1} parent=62 // pred_check
          %p1069 = pneg %p169
        $region69: #{tpu_custom_call.1} parent=62 // pred_check_branch
          %1071 = sbr.rel (%p1069) target = $region71
        $region70: #{tpu_custom_call.1} parent=62 // pred_region
          %s1072 = smul.u32 4, %s20
          %s1074 = ssub.s32 64, 64
          %1075 = vsyncadd %s1065, %s1074
          %s1076 = smul.addr %s1072, 16
          %s1077 = scalar_lea.hbm %s6, %s1076
          %s1079 = sshll.u32 %s1068, 4
          %s1080 = int_to_ptr.vmem [resolvable:$true] %s1079
          %1082 = dma.vmem_to_hbm [thread:$0]  %s1080, 64, %s1077, %s1065
        $region71: #{tpu_custom_call.1} parent=62 // pred_fallthru
          _
      $region63: #{tpu_custom_call.1} parent=5 // pred_fallthru
        _
      %p1083 = scmp.le.s32.totalorder 2, %s15
      // Predicated region
      $region72: #{tpu_custom_call.1} parent=5 // pred_check
        %p1084 = pneg %p1083
      $region73: #{tpu_custom_call.1} parent=5 // pred_check_branch
        %1086 = sbr.rel (%p1084) target = $region75
      $region74: #{tpu_custom_call.1} parent=5 // pred_region
        %s1087 = ssub.s32 %s15, 2
        // Predicated region
        $region76: #{tpu_custom_call.1} parent=74 // pred_check
          %p1088 = pneg %p175
        $region77: #{tpu_custom_call.1} parent=74 // pred_check_branch
          %1090 = sbr.rel (%p1088) target = $region79
        $region78: #{tpu_custom_call.1} parent=74 // pred_region
          %s1091 = sand.u32 %s160, 1
          %s1092 = scalar_lea.sflag [#allocation4], %s1091
          %s1093 = sand.u32 %s160, 1
          %s1094 = smul.addr %s1093, 4
          %s1095 = scalar_lea.vmem [#allocation3], %s1094
          %1096 = dma.done %s1092, 64
        $region79: #{tpu_custom_call.1} parent=74 // pred_fallthru
          _
      $region75: #{tpu_custom_call.1} parent=5 // pred_fallthru
        _
    $region6: #{tpu_custom_call.1} parent=1 // loop_footer
      %s19 = sadd.s32 1, %s15
    $region7: #{tpu_custom_call.1} parent=1 // loop_footer_branch
      %14 = sbr.rel target = $region3
    $region8: #{tpu_custom_call.1} parent=1 // loop_exit
      _
    %1097 = vsyncpa [#allocation4], 1
    %s1098 = scalar_lea.sflag [#allocation4], 1
    %1099 = vsyncpa %s1098, 1

</llo_original>
